<compile_context>
chip_gen: v5e
topology: v5e:2x2
jax: 0.10.0
libtpu: 0.0.40
codegen_flags: <defaults>
</compile_context>

<pallas_src>
import math
from functools import partial

import jax
import jax.numpy as jnp
from jax import lax
from jax.experimental import pallas as pl
from jax.experimental.pallas import tpu as pltpu

EPS = 1e-12  # torch F.normalize default eps


def _rmsnorm_kernel(x_ref, g_ref, o_ref, *, scale):
    # x_ref: (Bblk, C, tL) block; g_ref: (1, C, 1)
    x = x_ref[...].astype(jnp.float32)
    # Fold the static sqrt(C) scale into the tiny (1, C, 1) gain once per block.
    gscale = g_ref[...].astype(jnp.float32) * scale
    # Sum of squares over the channel axis (cross-sublane reduce -> XLU).
    sumsq = jnp.sum(x * x, axis=1, keepdims=True)            # (Bblk, 1, tL)
    # rsqrt on the EUP replaces sqrt + divide; clamping sumsq at eps^2 is
    # equivalent to torch's max(||x||, eps) clamp (sqrt is monotone, eps^2 is
    # a normal f32 value).
    inv = lax.rsqrt(jnp.maximum(sumsq, EPS * EPS))
    o_ref[...] = ((x * inv) * gscale).astype(o_ref.dtype)


def rmsnorm(x, g, *, vmem_budget_bytes=8 * 1024 * 1024):
    """x: (B, C, L), g: (1, C, 1) -> (B, C, L). Reduction over channel axis."""
    B, C, L = x.shape
    itemsize = jnp.dtype(x.dtype).itemsize
    kernel = partial(_rmsnorm_kernel, scale=float(C) ** 0.5)

    # ---- small-problem path: single invocation over the whole array --------
    # Full-array trailing block dims are exempt from the (8,128) rule, and a
    # single grid step avoids ~600-cycle per-step pipeline overhead.
    if B * C * L * itemsize <= 2 * 1024 * 1024:
        return pl.pallas_call(
            kernel,
            out_shape=jax.ShapeDtypeStruct((B, C, L), x.dtype),
            grid_spec=pltpu.PrefetchScalarGridSpec(
                num_scalar_prefetch=0,
                grid=(1,),
                in_specs=[
                    pl.BlockSpec((B, C, L), lambda i: (0, 0, 0)),
                    pl.BlockSpec((1, C, 1), lambda i: (0, 0, 0)),
                ],
                out_specs=pl.BlockSpec((B, C, L), lambda i: (0, 0, 0)),
            ),
            compiler_params=pltpu.CompilerParams(
                dimension_semantics=("arbitrary",)
            ),
        )(x, g)

    # ---- tiled path: lane-dense tiles on the length axis -------------------
    # Per grid step ~ 2 arrays (x, out) x 2 double buffers x C x tL x itemsize.
    tl = vmem_budget_bytes // (4 * C * itemsize)
    tl = max(128, min(2048, (tl // 128) * 128))
    if L % 128 == 0 and L <= tl:
        tl = L  # whole length fits in one lane-dense tile

    # Non-dividing lengths are handled by a partial trailing block: the block
    # last dim (tl) is a multiple of 128 so the BlockSpec is legal, OOB input
    # lanes hold unspecified values that only ever feed OOB output lanes
    # (per-column reduction), and OOB output lanes are never stored.
    out = pl.pallas_call(
        kernel,
        out_shape=jax.ShapeDtypeStruct((B, C, L), x.dtype),
        grid_spec=pltpu.PrefetchScalarGridSpec(
            num_scalar_prefetch=0,
            grid=(B, pl.cdiv(L, tl)),
            in_specs=[
                pl.BlockSpec((1, C, tl), lambda b, l: (b, 0, l)),
                pl.BlockSpec((1, C, 1), lambda b, l: (0, 0, 0)),
            ],
            out_specs=pl.BlockSpec((1, C, tl), lambda b, l: (b, 0, l)),
        ),
        compiler_params=pltpu.CompilerParams(
            dimension_semantics=("parallel", "parallel")
        ),
    )(x, g)
    return out


def rmsnorm_ref(x, g):
    # Pure-JAX reference mirroring torch F.normalize(x, dim=1) * g * sqrt(C)
    norm = jnp.sqrt(jnp.sum(x * x, axis=1, keepdims=True))
    return x / jnp.maximum(norm, EPS) * g * (x.shape[1] ** 0.5)


if __name__ == "__main__":
    key = jax.random.PRNGKey(0)

    # Primary small-shape check (module layout: (batch, dim, length)).
    B, C, L = 2, 4, 16
    x = jax.random.normal(key, (B, C, L), dtype=jnp.float32)
    # Parameter init matches nn.Parameter(torch.ones(1, dim, 1))
    g = jnp.ones((1, C, 1), dtype=jnp.float32)
    out = jax.block_until_ready(rmsnorm(x, g))
    ref = rmsnorm_ref(x, g)
    assert out.shape == (B, C, L)
    assert jnp.allclose(out, ref, atol=1e-5, rtol=1e-5)

    # Secondary check exercising the lane-dense tiled path with a ragged tail
    # (L not a multiple of the tile -> partial trailing block, no explicit pad).
    B2, C2, L2 = 2, 128, 4096 + 64
    k1, k2 = jax.random.split(key)
    x2 = jax.random.normal(k1, (B2, C2, L2), dtype=jnp.float32)
    g2 = 1.0 + 0.1 * jax.random.normal(k2, (1, C2, 1), dtype=jnp.float32)
    out2 = jax.block_until_ready(rmsnorm(x2, g2))
    ref2 = rmsnorm_ref(x2, g2)
    assert out2.shape == (B2, C2, L2)
    assert jnp.allclose(out2, ref2, atol=1e-4, rtol=1e-4)

    print("KERNEL_OK")
</pallas_src>

<mosaic_0001>
module attributes {stable_mosaic.version = 11 : i64} {
  func.func @_rmsnorm_kernel(%arg0: i32, %arg1: memref<2x4x16xf32, #tpu.memory_space<vmem>>, %arg2: memref<1x4x1xf32, #tpu.memory_space<vmem>>, %arg3: memref<2x4x16xf32, #tpu.memory_space<vmem>>) attributes {dimension_semantics = [#tpu.dimension_semantics<arbitrary>], iteration_bounds = array<i64: 1>, scalar_prefetch = 0 : i64, scratch_operands = 0 : i64, tpu.core_type = #tpu.core_type<tc>, window_params = [{pipeline_mode = #tpu.pipeline_mode<synchronous>, transform_indices = @transform_0, window_bounds = array<i64: 2, 4, 16>}, {pipeline_mode = #tpu.pipeline_mode<synchronous>, transform_indices = @transform_1, window_bounds = array<i64: 1, 4, 1>}, {pipeline_mode = #tpu.pipeline_mode<synchronous>, transform_indices = @transform_2, window_bounds = array<i64: 2, 4, 16>}]} {
    %c0 = arith.constant 0 : index
    %c0_0 = arith.constant 0 : index
    %c0_1 = arith.constant 0 : index
    %0 = vector.load %arg1[%c0, %c0_0, %c0_1] : memref<2x4x16xf32, #tpu.memory_space<vmem>>, vector<2x4x16xf32>
    %c0_2 = arith.constant 0 : index
    %c0_3 = arith.constant 0 : index
    %c0_4 = arith.constant 0 : index
    %1 = vector.load %arg2[%c0_2, %c0_3, %c0_4] : memref<1x4x1xf32, #tpu.memory_space<vmem>>, vector<1x4x1xf32>
    %cst = arith.constant 2.000000e+00 : f32
    %2 = vector.broadcast %cst : f32 to vector<1x4x1xf32>
    %3 = arith.mulf %1, %2 : vector<1x4x1xf32>
    %4 = arith.mulf %0, %0 : vector<2x4x16xf32>
    %cst_5 = arith.constant dense<0.000000e+00> : vector<2x16xf32>
    %5 = vector.multi_reduction <add>, %4, %cst_5 [1] : vector<2x4x16xf32> to vector<2x16xf32>
    %6 = vector.shape_cast %5 : vector<2x16xf32> to vector<2x1x16xf32>
    %cst_6 = arith.constant 1.000000e-24 : f32
    %7 = vector.broadcast %cst_6 : f32 to vector<2x1x16xf32>
    %8 = arith.maximumf %6, %7 : vector<2x1x16xf32>
    %9 = math.rsqrt %8 : vector<2x1x16xf32>
    %10 = vector.broadcast %9 : vector<2x1x16xf32> to vector<2x4x16xf32>
    %11 = arith.mulf %0, %10 : vector<2x4x16xf32>
    %12 = vector.broadcast %3 : vector<1x4x1xf32> to vector<2x4x16xf32>
    %13 = arith.mulf %11, %12 : vector<2x4x16xf32>
    %c0_7 = arith.constant 0 : index
    %c0_8 = arith.constant 0 : index
    %c0_9 = arith.constant 0 : index
    %14 = vector.load %arg3[%c0_7, %c0_8, %c0_9] : memref<2x4x16xf32, #tpu.memory_space<vmem>>, vector<2x4x16xf32>
    tpu.vector_store %arg3[%c0_7, %c0_8, %c0_9], %13 {strides = array<i32>} : memref<2x4x16xf32, #tpu.memory_space<vmem>>, vector<2x4x16xf32>,
    return
  }
  func.func @transform_0(%arg0: i32) -> (i32, i32, i32) {
    %c0_i32 = arith.constant 0 : i32
    %c0_i32_0 = arith.constant 0 : i32
    %c0_i32_1 = arith.constant 0 : i32
    %c0_i32_2 = arith.constant 0 : i32
    return %c0_i32, %c0_i32_0, %c0_i32_1 : i32, i32, i32
  }
  func.func @transform_1(%arg0: i32) -> (i32, i32, i32) {
    %c0_i32 = arith.constant 0 : i32
    %c0_i32_0 = arith.constant 0 : i32
    %c0_i32_1 = arith.constant 0 : i32
    %c0_i32_2 = arith.constant 0 : i32
    return %c0_i32, %c0_i32_0, %c0_i32_1 : i32, i32, i32
  }
  func.func @transform_2(%arg0: i32) -> (i32, i32, i32) {
    %c0_i32 = arith.constant 0 : i32
    %c0_i32_0 = arith.constant 0 : i32
    %c0_i32_1 = arith.constant 0 : i32
    %c0_i32_2 = arith.constant 0 : i32
    return %c0_i32, %c0_i32_0, %c0_i32_1 : i32, i32, i32
  }
}

</mosaic_0001>

<llo_original>
// kernel: tpu_custom_call.1
$region0: #{tpu_custom_call.1}
  #allocation0 [shape = 'u32[]', space=smem, size = 0x4, offset = 0x4, fixed_abs, tag = 'smem constant byte address 0x4 - core index']
  #allocation1 [shape = 'u32[72,128]{1,0:T(1,128)}', space=vmem, size = 0x9000, scoped, tag = 'internal scratch']
  %s0 = inlined_call_operand.hbm [shape: f32[2,4,16], index: 0, kind: input, shape index: {}]
  %s1 = inlined_call_operand.vmem [shape: f32[1,4,1], index: 1, kind: input, shape index: {}]
  %s2 = inlined_call_operand.hbm [shape: f32[2,4,16], index: 2, kind: output, shape index: {}]
  %s3 = sld [smem:[#allocation0]]
  $region22: #{tpu_custom_call.1} parent=0
    _
  %s5 = ssub.s32 1, %s3
  %s6 = scalar_select 0, %s5, %s3
  $region1: #{tpu_custom_call.1} parent=0
    #allocation2 [shape = 'u8[4096]{0}', space=vmem, size = 0x1000, scoped, tag = 'input window, operand 0, single buffered']
    #allocation3 [shape = 's32[1]{0}', space=sflag, size = 0x4, scoped, tag = 'scoped memory for tpu_custom_call.1']
    #allocation4 [shape = 's32[1]{0}', space=sflag, size = 0x4, scoped, tag = 'scoped memory for tpu_custom_call.1']
    #allocation5 [shape = 'u8[4096]{0}', space=vmem, size = 0x1000, scoped, tag = 'output window, operand 0, single buffered']
    %7 = vsyncpa [#allocation3], 0
    %8 = vsyncpa [#allocation4], 0
    // Predicated region
    $region2: #{tpu_custom_call.1} parent=1 // pred_check
      _
    $region3: #{tpu_custom_call.1} parent=1 // pred_check_branch
      %10 = sbr.rel (0) target = $region5
    $region4: #{tpu_custom_call.1} parent=1 // pred_region
      %12 = vsyncadd [#allocation3], 0
      %s13 = sshll.u32 %s0, 4
      %s14 = int_to_ptr.hbm [resolvable:$true] %s13
      %s15 = sshll.u32 [#allocation2], 4
      %s16 = int_to_ptr.vmem [resolvable:$true] %s15
      %21 = dma.hbm_to_vmem [thread:$0]  %s14, 128, %s16, [#allocation3], 64, 64, 4
    $region5: #{tpu_custom_call.1} parent=1 // pred_fallthru
      _
    // Predicated region
    $region6: #{tpu_custom_call.1} parent=1 // pred_check
      _
    $region7: #{tpu_custom_call.1} parent=1 // pred_check_branch
      %23 = sbr.rel (0) target = $region9
    $region8: #{tpu_custom_call.1} parent=1 // pred_region
      _
    $region9: #{tpu_custom_call.1} parent=1 // pred_fallthru
      _
    // Predicated region
    $region10: #{tpu_custom_call.1} parent=1 // pred_check
      _
    $region11: #{tpu_custom_call.1} parent=1 // pred_check_branch
      %25 = sbr.rel (0) target = $region13
    $region12: #{tpu_custom_call.1} parent=1 // pred_region
      %27 = dma.done [#allocation3], 128
    $region13: #{tpu_custom_call.1} parent=1 // pred_fallthru
      _
    %v28 = vld [vmem:[#allocation2] sm:$0xf]
    %v29 = vld [vmem:[#allocation2 + $0x4] sm:$0xf]
    %v30 = vld [vmem:[%s1] sm:$0xf]
    %v31 = vmul.f32 %v30, 2.0
    %v32 = vmul.f32 %v28, %v28
    %v33 = vmul.f32 %v29, %v29
    %vm34 = vcmask 125952
    %v35 = vsel %vm34, %v32, 0.0
    %v36 = vrot.slane %v35, 4
    %v37 = vadd.f32 %v35, %v36
    %v38 = vrot.slane %v37, 2
    %v39 = vadd.f32 %v37, %v38
    %v40 = vrot.slane %v39, 1
    %v41 = vadd.f32 %v39, %v40
    %v42 = vsel %vm34, %v33, 0.0
    %v43 = vrot.slane %v42, 4
    %v44 = vadd.f32 %v42, %v43
    %v45 = vrot.slane %v44, 2
    %v46 = vadd.f32 %v44, %v45
    %v47 = vrot.slane %v46, 1
    %v48 = vadd.f32 %v46, %v47
    %v49 = vmax.f32 %v41, 1e-24
    %v50 = vmax.f32 %v48, 1e-24
    %v51 = vrsqrt.pop %v49
    %v52 = vmul.f32 %v51, %v49
    %v53 = vmul.f32 %v52, %v51
    %v54 = vmul.f32 0.5, %v53
    %v55 = vsub.f32 1.5, %v54
    %v56 = vmul.f32 %v51, %v55
    %vm57 = vweird.f32 %v49
    %vm58 = vweird.f32 %v51
    %vm59 = vmor %vm57, %vm58
    %v60 = vsel %vm59, %v51, %v56
    %v61 = vrsqrt.pop %v50
    %v62 = vmul.f32 %v61, %v50
    %v63 = vmul.f32 %v62, %v61
    %v64 = vmul.f32 0.5, %v63
    %v65 = vsub.f32 1.5, %v64
    %v66 = vmul.f32 %v61, %v65
    %vm67 = vweird.f32 %v50
    %vm68 = vweird.f32 %v61
    %vm69 = vmor %vm67, %vm68
    %v70 = vsel %vm69, %v61, %v66
    %v71 = vmul.f32 %v28, %v60
    %v72 = vmul.f32 %v29, %v70
    %74 = vset.pattern.permute.xlu0 0
    %75 = vperm.xlu0 %74, %v31
    %v76 = vpop.permute.xlu0 %75
    %v78 = vmul.f32 %v71, %v76
    %v79 = vmul.f32 %v72, %v76
    %80 = vst.msk [vmem:[#allocation5] sm:$0xf] %vm34, %v78
    %81 = vst.msk [vmem:[#allocation5 + $0x4] sm:$0xf] %vm34, %v79
    // Predicated region
    $region14: #{tpu_custom_call.1} parent=1 // pred_check
      _
    $region15: #{tpu_custom_call.1} parent=1 // pred_check_branch
      %83 = sbr.rel (0) target = $region17
    $region16: #{tpu_custom_call.1} parent=1 // pred_region
      %85 = vsyncadd [#allocation4], 0
      %s86 = sshll.u32 [#allocation5], 4
      %s87 = int_to_ptr.vmem [resolvable:$true] %s86
      %s88 = sshll.u32 %s2, 4
      %s89 = int_to_ptr.hbm [resolvable:$true] %s88
      %94 = dma.vmem_to_hbm [thread:$0]  %s87, 128, %s89, [#allocation4], 64, 64, 4
    $region17: #{tpu_custom_call.1} parent=1 // pred_fallthru
      _
    // Predicated region
    $region18: #{tpu_custom_call.1} parent=1 // pred_check
      _
    $region19: #{tpu_custom_call.1} parent=1 // pred_check_branch
      %96 = sbr.rel (0) target = $region21
    $region20: #{tpu_custom_call.1} parent=1 // pred_region
      %98 = dma.done [#allocation4], 128
    $region21: #{tpu_custom_call.1} parent=1 // pred_fallthru
      _
    %99 = vsyncpa [#allocation3], 1
    %100 = vsyncpa [#allocation4], 1

</llo_original>
